<compile_context>
chip_gen: v7x
topology: tpu7x:2x2x1
jax: 0.10.0
libtpu: 0.0.40
codegen_flags: <defaults>
</compile_context>

<pallas_src>
import functools

import jax
import jax.numpy as jnp
from jax.experimental import pallas as pl
from jax.experimental.pallas import tpu as pltpu

_LANE = 128


def _round_up(x, m):
    return ((x + m - 1) // m) * m


def _vmem_capacity_bytes():
    """Per-core VMEM capacity; conservative 64 MiB (v7x) fallback."""
    try:
        info = pltpu.get_tpu_info()
        cap = getattr(info, "vmem_capacity_bytes", None)
        if cap:
            return int(cap)
    except Exception:
        pass
    return 64 * 1024 * 1024


def _vmem_limit(needed_bytes, cap_bytes):
    """Scoped-VMEM limit sized from the actual buffers (defaults: 16/32 MiB)."""
    limit = max(32 << 20, int(needed_bytes * 1.4) + (2 << 20))
    return int(min(limit, int(cap_bytes * 0.9)))


# ---------------------------------------------------------------------------
# Fused path: everything resident in VMEM, adj read from HBM exactly once.
# ---------------------------------------------------------------------------
def _gnn_fused_kernel(adj_ref, x_ref, w1_ref, w2_ref, w3_ref, z_ref):
    adj = adj_ref[...]            # [N, N]    bf16 (stationary across all 3 layers)
    x = x_ref[...]                # [N, Din]  bf16
    w1 = w1_ref[...]              # [Din, Hp] bf16
    w2 = w2_ref[...]              # [Hp, Hp]  bf16
    w3 = w3_ref[...]              # [Hp, Hp]  bf16

    d_in = x.shape[1]
    hp = w1.shape[1]

    # ---- layer 1: tanh(adj @ (x @ W1)) -----------------------------------
    # Reassociate as (adj @ x) @ W1 only when it saves MXU lane-tiles on the
    # N x N contraction (d_in spans fewer 128-lane tiles than Hp).  At
    # Hp == 128 both associations cost the same vmatmuls, and the standard
    # order avoids an extra bf16 rounding of the adj @ x intermediate.
    if pl.cdiv(d_in, _LANE) < pl.cdiv(hp, _LANE):
        ax = jnp.dot(adj, x, preferred_element_type=jnp.float32)
        h1 = jnp.dot(ax.astype(w1.dtype), w1, preferred_element_type=jnp.float32)
    else:
        xw = jnp.dot(x, w1, preferred_element_type=jnp.float32)
        h1 = jnp.dot(adj, xw.astype(adj.dtype), preferred_element_type=jnp.float32)
    hidden = jnp.tanh(h1)                                        # f32 [N, Hp]

    # ---- layer 2: tanh(adj @ (hidden @ W2)) --------------------------------
    hw = jnp.dot(hidden.astype(w2.dtype), w2, preferred_element_type=jnp.float32)
    mid = jnp.tanh(jnp.dot(adj, hw.astype(adj.dtype),
                           preferred_element_type=jnp.float32))  # f32 [N, Hp]

    # Fold hidden into the running max now so it doesn't stay live below.
    z_partial = jnp.maximum(hidden, mid)

    # ---- layer 3 (identity activation): adj @ (mid @ W3) -------------------
    mw = jnp.dot(mid.astype(w3.dtype), w3, preferred_element_type=jnp.float32)
    final = jnp.dot(adj, mw.astype(adj.dtype), preferred_element_type=jnp.float32)

    z_ref[...] = jnp.maximum(z_partial, final).astype(z_ref.dtype)


def _forward_fused(adj, x, params, h_out, vmem_cap, fused_bytes):
    bf16 = jnp.bfloat16
    n, d_in = x.shape
    w1_b, w2_b, w3_b = params["w1_b"], params["w2_b"], params["w3_b"]
    hp = w1_b.shape[1]

    adj_b = adj.astype(bf16)
    x_b = x.astype(bf16)

    # Cost estimate matches whichever layer-1 association the kernel takes.
    if pl.cdiv(d_in, _LANE) < pl.cdiv(hp, _LANE):
        l1_flops = 2 * (n * n * d_in + n * d_in * hp)
    else:
        l1_flops = 2 * (n * d_in * hp + n * n * hp)
    flops = l1_flops + 4 * (n * hp * hp + n * n * hp)
    bytes_accessed = (adj_b.size + x_b.size + w1_b.size + w2_b.size + w3_b.size) * 2 \
        + n * hp * 4
    cost = pl.CostEstimate(flops=int(flops), transcendentals=int(2 * n * hp),
                           bytes_accessed=int(bytes_accessed))

    vmem = pl.BlockSpec(memory_space=pltpu.MemorySpace.VMEM)
    z_full = pl.pallas_call(
        _gnn_fused_kernel,
        out_shape=jax.ShapeDtypeStruct((n, hp), jnp.float32),
        in_specs=[vmem, vmem, vmem, vmem, vmem],
        out_specs=vmem,
        compiler_params=pltpu.CompilerParams(
            vmem_limit_bytes=_vmem_limit(fused_bytes, vmem_cap)),
        cost_estimate=cost,
    )(adj_b, x_b, w1_b, w2_b, w3_b)
    return z_full[:, :h_out]


# ---------------------------------------------------------------------------
# Streamed path: adj row-tiled and double-buffered, one pallas_call per layer.
# ---------------------------------------------------------------------------
def _adj_layer_kernel(adj_ref, xw_ref, out_ref, *, apply_tanh):
    # adj_ref: (TM, Np) bf16 row tile (streamed / double-buffered by BlockSpec)
    # xw_ref:  (Np, Hp) bf16 (VMEM-resident; same block every grid step)
    acc = jnp.dot(adj_ref[...], xw_ref[...], preferred_element_type=jnp.float32)
    if apply_tanh:
        acc = jnp.tanh(acc)
    out_ref[...] = acc.astype(out_ref.dtype)


def _adj_layer_max_kernel(adj_ref, xw_ref, hid_ref, mid_ref, z_ref):
    # Layer 3 (identity activation) fused with the 3-way elementwise max.
    final = jnp.dot(adj_ref[...], xw_ref[...], preferred_element_type=jnp.float32)
    z_ref[...] = jnp.maximum(jnp.maximum(hid_ref[...], mid_ref[...]),
                             final).astype(z_ref.dtype)


def _streamed_adj_layer(adj_b, xw_b, *, tm, apply_tanh, vmem_cap):
    np_, hp = adj_b.shape[0], xw_b.shape[1]
    grid = (np_ // tm,)
    cost = pl.CostEstimate(
        flops=int(2 * np_ * np_ * hp),
        transcendentals=int(np_ * hp) if apply_tanh else 0,
        bytes_accessed=int(adj_b.size * 2 + xw_b.size * 2 + np_ * hp * 4))
    vmem_needed = 2 * tm * np_ * 2 + 2 * np_ * hp * 2 + 2 * tm * hp * 4
    return pl.pallas_call(
        functools.partial(_adj_layer_kernel, apply_tanh=apply_tanh),
        out_shape=jax.ShapeDtypeStruct((np_, hp), jnp.float32),
        grid=grid,
        in_specs=[pl.BlockSpec((tm, np_), lambda i: (i, 0)),    # streamed adj rows
                  pl.BlockSpec((np_, hp), lambda i: (0, 0))],   # resident X @ W
        out_specs=pl.BlockSpec((tm, hp), lambda i: (i, 0)),
        compiler_params=pltpu.CompilerParams(
            dimension_semantics=("parallel",),                  # v7x: use both TCs
            vmem_limit_bytes=_vmem_limit(vmem_needed, vmem_cap)),
        cost_estimate=cost,
    )(adj_b, xw_b)


def _streamed_adj_layer_max(adj_b, xw_b, hidden, mid, *, tm, vmem_cap):
    np_, hp = adj_b.shape[0], xw_b.shape[1]
    grid = (np_ // tm,)
    cost = pl.CostEstimate(
        flops=int(2 * np_ * np_ * hp),
        transcendentals=0,
        bytes_accessed=int(adj_b.size * 2 + xw_b.size * 2
                           + hidden.size * 4 + mid.size * 4 + np_ * hp * 4))
    vmem_needed = 2 * tm * np_ * 2 + 2 * np_ * hp * 2 + 3 * 2 * tm * hp * 4
    return pl.pallas_call(
        _adj_layer_max_kernel,
        out_shape=jax.ShapeDtypeStruct((np_, hp), jnp.float32),
        grid=grid,
        in_specs=[pl.BlockSpec((tm, np_), lambda i: (i, 0)),
                  pl.BlockSpec((np_, hp), lambda i: (0, 0)),
                  pl.BlockSpec((tm, hp), lambda i: (i, 0)),     # hidden row tile
                  pl.BlockSpec((tm, hp), lambda i: (i, 0))],    # mid row tile
        out_specs=pl.BlockSpec((tm, hp), lambda i: (i, 0)),
        compiler_params=pltpu.CompilerParams(
            dimension_semantics=("parallel",),
            vmem_limit_bytes=_vmem_limit(vmem_needed, vmem_cap)),
        cost_estimate=cost,
    )(adj_b, xw_b, hidden, mid)


def _forward_streamed(adj, x, params, h_out, vmem_cap):
    f32, bf16 = jnp.float32, jnp.bfloat16
    n, d_in = x.shape
    w1_b, w2_b, w3_b = params["w1_b"], params["w2_b"], params["w3_b"]
    hp = w1_b.shape[1]

    tm = 256                       # MXU-friendly on v5e (128x) and v6e/v7x (256x)
    np_ = _round_up(n, tm)

    # Zero-pad adj to (Np, Np): padded rows/cols are exactly zero, so every
    # padded output row is tanh(0)=0 (or 0) and is sliced off at the end.
    adj_p = jnp.zeros((np_, np_), f32).at[:n, :n].set(adj.astype(f32))
    adj_b = adj_p.astype(bf16)
    x_p = jnp.zeros((np_, d_in), bf16).at[:n, :].set(x.astype(bf16))

    # The per-layer "X @ W" is tiny ([Np,Hp] x [Hp,Hp]); leave it to XLA and
    # spend the Pallas kernels on the big N*N*Hp adj GEMM.
    xw1 = jnp.dot(x_p, w1_b, preferred_element_type=f32).astype(bf16)
    hidden = _streamed_adj_layer(adj_b, xw1, tm=tm, apply_tanh=True,
                                 vmem_cap=vmem_cap)                    # f32 [Np,Hp]

    xw2 = jnp.dot(hidden.astype(bf16), w2_b, preferred_element_type=f32).astype(bf16)
    mid = _streamed_adj_layer(adj_b, xw2, tm=tm, apply_tanh=True,
                              vmem_cap=vmem_cap)                       # f32 [Np,Hp]

    xw3 = jnp.dot(mid.astype(bf16), w3_b, preferred_element_type=f32).astype(bf16)
    z = _streamed_adj_layer_max(adj_b, xw3, hidden, mid, tm=tm, vmem_cap=vmem_cap)
    return z[:n, :h_out]


# ---------------------------------------------------------------------------
# Public API
# ---------------------------------------------------------------------------
def prepare_gnn_params(w1, w2, w3):
    """Pad the hidden width to a lane-dense multiple of 128 and cast to bf16.

    Done once at parameter-init time (hoisted out of the per-call path).
    Zero padding is exact because tanh(0) == 0 and the pad is sliced off.
    """
    d_in, h = w1.shape
    assert w2.shape == (h, h) and w3.shape == (h, h), \
        "torch.stack in the reference requires equal hidden dims"
    hp = _round_up(h, _LANE)
    f32, bf16 = jnp.float32, jnp.bfloat16
    w1p = jnp.zeros((d_in, hp), f32).at[:, :h].set(w1.astype(f32))
    w2p = jnp.zeros((hp, hp), f32).at[:h, :h].set(w2.astype(f32))
    w3p = jnp.zeros((hp, hp), f32).at[:h, :h].set(w3.astype(f32))
    return {"w1_b": w1p.astype(bf16), "w2_b": w2p.astype(bf16),
            "w3_b": w3p.astype(bf16)}


def multi_layer_gnn_forward(adj, x, params, *, h_out, path="auto"):
    """Fused 3-layer GCN forward.  adj:[N,N], x:[N,Din] -> z:[N,H] float32."""
    n, d_in = x.shape
    assert adj.shape == (n, n)
    hp = params["w1_b"].shape[1]

    vmem_cap = _vmem_capacity_bytes()
    # Estimated fully-fused footprint: bf16 adj/x/weights + f32 z output +
    # ~5 live f32 [N, Hp] intermediates inside the kernel.
    fused_bytes = (2 * n * n + 2 * n * d_in
                   + 2 * (d_in * hp + 2 * hp * hp)
                   + 4 * n * hp + 5 * 4 * n * hp)

    if path == "auto":
        # Cutover re-derived per chip: ~N<=4.5k on v7x (64 MiB), ~6k+ on
        # v5e/v6e (128 MiB).  Beyond that, stream adj row tiles instead.
        path = "fused" if fused_bytes <= int(0.65 * vmem_cap) else "streamed"

    if path == "fused":
        return _forward_fused(adj, x, params, h_out, vmem_cap, fused_bytes)
    return _forward_streamed(adj, x, params, h_out, vmem_cap)


def reference_forward(adj, x, w1, w2, w3):
    hidden = jnp.tanh(adj @ (x @ w1))
    mid = jnp.tanh(adj @ (hidden @ w2))
    final = adj @ (mid @ w3)
    return jnp.maximum(jnp.maximum(hidden, mid), final)


def _make_inputs(key, n, d_in, h):
    k_adj, k_x, k_w1, k_w2, k_w3 = jax.random.split(key, 5)
    # Dense "normalized adjacency": symmetric random graph + self-loops,
    # row-normalized.
    a = (jax.random.uniform(k_adj, (n, n)) > 0.7).astype(jnp.float32)
    a = jnp.maximum(a, a.T) + jnp.eye(n, dtype=jnp.float32)
    adj = a / jnp.sum(a, axis=1, keepdims=True)
    x = jax.random.normal(k_x, (n, d_in), dtype=jnp.float32)
    # normal_init: N(0, 0.1) weights.
    w1 = 0.1 * jax.random.normal(k_w1, (d_in, h), dtype=jnp.float32)
    w2 = 0.1 * jax.random.normal(k_w2, (h, h), dtype=jnp.float32)
    w3 = 0.1 * jax.random.normal(k_w3, (h, h), dtype=jnp.float32)
    return adj, x, w1, w2, w3


if __name__ == "__main__":
    k_small, k_big = jax.random.split(jax.random.PRNGKey(0))
    fwd = jax.jit(multi_layer_gnn_forward, static_argnames=("h_out", "path"))

    # --- small demo shapes (module defaults): exercises the fused path ------
    N, D_IN, H = 16, 8, 32
    adj, x, w1, w2, w3 = _make_inputs(k_small, N, D_IN, H)
    params = prepare_gnn_params(w1, w2, w3)          # pad/cast once, reused

    z = fwd(adj, x, params, h_out=H, path="auto")    # -> fused (fits in VMEM)
    jax.block_until_ready(z)
    z_ref = reference_forward(adj, x, w1, w2, w3)
    assert z.shape == (N, H)
    # bf16 MXU operands (f32 accumulation) -> relaxed tolerance vs f32 ref.
    assert jnp.allclose(z, z_ref, atol=2e-2, rtol=2e-2), "fused path mismatch"

    # --- larger graph: exercises the row-tiled / pipelined streamed path ----
    N2 = 512
    adj2, x2, w1b, w2b, w3b = _make_inputs(k_big, N2, D_IN, H)
    params2 = prepare_gnn_params(w1b, w2b, w3b)
    z2 = fwd(adj2, x2, params2, h_out=H, path="streamed")
    jax.block_until_ready(z2)
    z2_ref = reference_forward(adj2, x2, w1b, w2b, w3b)
    assert z2.shape == (N2, H)
    assert jnp.allclose(z2, z2_ref, atol=2e-2, rtol=2e-2), "streamed path mismatch"

    print("KERNEL_OK")
</pallas_src>

<mosaic_0001>
module attributes {stable_mosaic.version = 11 : i64} {
  func.func @_gnn_fused_kernel(%arg0: memref<16x16xbf16, #tpu.memory_space<vmem>>, %arg1: memref<16x8xbf16, #tpu.memory_space<vmem>>, %arg2: memref<8x128xbf16, #tpu.memory_space<vmem>>, %arg3: memref<128x128xbf16, #tpu.memory_space<vmem>>, %arg4: memref<128x128xbf16, #tpu.memory_space<vmem>>, %arg5: memref<16x128xf32, #tpu.memory_space<vmem>>) attributes {dimension_semantics = [], scalar_prefetch = 0 : i64, scratch_operands = 0 : i64, tpu.core_type = #tpu.core_type<tc>} {
    %c0 = arith.constant 0 : index
    %c0_0 = arith.constant 0 : index
    %0 = vector.load %arg0[%c0, %c0_0] : memref<16x16xbf16, #tpu.memory_space<vmem>>, vector<16x16xbf16>
    %c0_1 = arith.constant 0 : index
    %c0_2 = arith.constant 0 : index
    %1 = vector.load %arg1[%c0_1, %c0_2] : memref<16x8xbf16, #tpu.memory_space<vmem>>, vector<16x8xbf16>
    %c0_3 = arith.constant 0 : index
    %c0_4 = arith.constant 0 : index
    %2 = vector.load %arg2[%c0_3, %c0_4] : memref<8x128xbf16, #tpu.memory_space<vmem>>, vector<8x128xbf16>
    %c0_5 = arith.constant 0 : index
    %c0_6 = arith.constant 0 : index
    %3 = vector.load %arg3[%c0_5, %c0_6] : memref<128x128xbf16, #tpu.memory_space<vmem>>, vector<128x128xbf16>
    %c0_7 = arith.constant 0 : index
    %c0_8 = arith.constant 0 : index
    %4 = vector.load %arg4[%c0_7, %c0_8] : memref<128x128xbf16, #tpu.memory_space<vmem>>, vector<128x128xbf16>
    %cst = arith.constant dense<0.000000e+00> : vector<16x128xf32>
    %5 = tpu.matmul %1, %2, %cst {dimension_numbers = #tpu.dot_dimension_numbers<[1], [0], [0], [1], [0, 0, 1, 1], [], []>} : vector<16x8xbf16>, vector<8x128xbf16>, vector<16x128xf32> -> vector<16x128xf32>
    %6 = arith.truncf %5 : vector<16x128xf32> to vector<16x128xbf16>
    %cst_9 = arith.constant dense<0.000000e+00> : vector<16x128xf32>
    %7 = tpu.matmul %0, %6, %cst_9 {dimension_numbers = #tpu.dot_dimension_numbers<[1], [0], [0], [1], [0, 0, 1, 1], [], []>} : vector<16x16xbf16>, vector<16x128xbf16>, vector<16x128xf32> -> vector<16x128xf32>
    %8 = math.tanh %7 : vector<16x128xf32>
    %9 = arith.truncf %8 : vector<16x128xf32> to vector<16x128xbf16>
    %cst_10 = arith.constant dense<0.000000e+00> : vector<16x128xf32>
    %10 = tpu.matmul %9, %3, %cst_10 {dimension_numbers = #tpu.dot_dimension_numbers<[1], [0], [0], [1], [0, 0, 1, 1], [], []>} : vector<16x128xbf16>, vector<128x128xbf16>, vector<16x128xf32> -> vector<16x128xf32>
    %11 = arith.truncf %10 : vector<16x128xf32> to vector<16x128xbf16>
    %cst_11 = arith.constant dense<0.000000e+00> : vector<16x128xf32>
    %12 = tpu.matmul %0, %11, %cst_11 {dimension_numbers = #tpu.dot_dimension_numbers<[1], [0], [0], [1], [0, 0, 1, 1], [], []>} : vector<16x16xbf16>, vector<16x128xbf16>, vector<16x128xf32> -> vector<16x128xf32>
    %13 = math.tanh %12 : vector<16x128xf32>
    %14 = arith.maximumf %8, %13 : vector<16x128xf32>
    %15 = arith.truncf %13 : vector<16x128xf32> to vector<16x128xbf16>
    %cst_12 = arith.constant dense<0.000000e+00> : vector<16x128xf32>
    %16 = tpu.matmul %15, %4, %cst_12 {dimension_numbers = #tpu.dot_dimension_numbers<[1], [0], [0], [1], [0, 0, 1, 1], [], []>} : vector<16x128xbf16>, vector<128x128xbf16>, vector<16x128xf32> -> vector<16x128xf32>
    %17 = arith.truncf %16 : vector<16x128xf32> to vector<16x128xbf16>
    %cst_13 = arith.constant dense<0.000000e+00> : vector<16x128xf32>
    %18 = tpu.matmul %0, %17, %cst_13 {dimension_numbers = #tpu.dot_dimension_numbers<[1], [0], [0], [1], [0, 0, 1, 1], [], []>} : vector<16x16xbf16>, vector<16x128xbf16>, vector<16x128xf32> -> vector<16x128xf32>
    %19 = arith.maximumf %14, %18 : vector<16x128xf32>
    %c0_14 = arith.constant 0 : index
    %c0_15 = arith.constant 0 : index
    %20 = vector.load %arg5[%c0_14, %c0_15] : memref<16x128xf32, #tpu.memory_space<vmem>>, vector<16x128xf32>
    tpu.vector_store %arg5[%c0_14, %c0_15], %19 {strides = array<i32>} : memref<16x128xf32, #tpu.memory_space<vmem>>, vector<16x128xf32>,
    return
  }
}

</mosaic_0001>

<llo_original>
// kernel: multi_layer_gnn_forward.1
$region0: #{multi_layer_gnn_forward.1}
  #allocation0 [shape = 'u32[]', space=smem, size = 0x4, offset = 0x4, fixed_abs, tag = 'smem constant byte address 0x4 - core index']
  #allocation1 [shape = 'u32[144,128]{1,0:T(1,128)}', space=vmem, size = 0x12000, scoped, tag = 'internal scratch']
  %s0 = inlined_call_operand.vmem [shape: bf16[16,16], index: 0, kind: input, shape index: {}]
  %s1 = inlined_call_operand.vmem [shape: bf16[16,8], index: 1, kind: input, shape index: {}]
  %s2 = inlined_call_operand.vmem [shape: bf16[8,128], index: 2, kind: input, shape index: {}]
  %s3 = inlined_call_operand.hbm [shape: bf16[128,128], index: 3, kind: input, shape index: {}]
  %s4 = inlined_call_operand.hbm [shape: bf16[128,128], index: 4, kind: input, shape index: {}]
  %s5 = inlined_call_operand.hbm [shape: f32[16,128], index: 5, kind: output, shape index: {}]
  %s6 = sld [smem:[#allocation0]]
  $region38: #{multi_layer_gnn_forward.1} parent=0
    _
  %s8 = ssub.s32 1, %s6
  %s9 = scalar_select 0, %s8, %s6
  $region1: #{multi_layer_gnn_forward.1} parent=0
    #allocation2 [shape = 'u8[32768]{0}', space=vmem, size = 0x8000, scoped, tag = 'input window, operand 3, single buffered']
    #allocation3 [shape = 's32[1]{0}', space=sflag, size = 0x4, scoped, tag = 'scoped memory for multi_layer_gnn_forward.1']
    #allocation4 [shape = 's32[1]{0}', space=sflag, size = 0x4, scoped, tag = 'scoped memory for multi_layer_gnn_forward.1']
    #allocation5 [shape = 'u8[32768]{0}', space=vmem, size = 0x8000, scoped, tag = 'input window, operand 4, single buffered']
    #allocation6 [shape = 's32[1]{0}', space=sflag, size = 0x4, scoped, tag = 'scoped memory for multi_layer_gnn_forward.1']
    #allocation7 [shape = 'u8[8192]{0}', space=vmem, size = 0x2000, scoped, tag = 'output window, operand 0, single buffered']
    %10 = vsyncpa [#allocation3], 0
    %11 = vsyncpa [#allocation6], 0
    %12 = vsyncpa [#allocation4], 0
    // Predicated region
    $region2: #{multi_layer_gnn_forward.1} parent=1 // pred_check
      _
    $region3: #{multi_layer_gnn_forward.1} parent=1 // pred_check_branch
      %14 = sbr.rel (0) target = $region5
    $region4: #{multi_layer_gnn_forward.1} parent=1 // pred_region
      _
    $region5: #{multi_layer_gnn_forward.1} parent=1 // pred_fallthru
      _
    // Predicated region
    $region6: #{multi_layer_gnn_forward.1} parent=1 // pred_check
      _
    $region7: #{multi_layer_gnn_forward.1} parent=1 // pred_check_branch
      %16 = sbr.rel (0) target = $region9
    $region8: #{multi_layer_gnn_forward.1} parent=1 // pred_region
      _
    $region9: #{multi_layer_gnn_forward.1} parent=1 // pred_fallthru
      _
    // Predicated region
    $region10: #{multi_layer_gnn_forward.1} parent=1 // pred_check
      _
    $region11: #{multi_layer_gnn_forward.1} parent=1 // pred_check_branch
      %18 = sbr.rel (0) target = $region13
    $region12: #{multi_layer_gnn_forward.1} parent=1 // pred_region
      _
    $region13: #{multi_layer_gnn_forward.1} parent=1 // pred_fallthru
      _
    // Predicated region
    $region14: #{multi_layer_gnn_forward.1} parent=1 // pred_check
      _
    $region15: #{multi_layer_gnn_forward.1} parent=1 // pred_check_branch
      %20 = sbr.rel (0) target = $region17
    $region16: #{multi_layer_gnn_forward.1} parent=1 // pred_region
      %s22 = ssub.s32 1024, 1024
      %23 = vsyncadd [#allocation3], %s22
      %s24 = sshll.u32 [#allocation2], 4
      %s25 = int_to_ptr.vmem [resolvable:$true] %s24
      %30 = dma.hbm_to_vmem [thread:$0]  %s3, 1024, %s25, [#allocation3], 64, 64, 4
    $region17: #{multi_layer_gnn_forward.1} parent=1 // pred_fallthru
      _
    // Predicated region
    $region18: #{multi_layer_gnn_forward.1} parent=1 // pred_check
      _
    $region19: #{multi_layer_gnn_forward.1} parent=1 // pred_check_branch
      %32 = sbr.rel (0) target = $region21
    $region20: #{multi_layer_gnn_forward.1} parent=1 // pred_region
      %s34 = ssub.s32 1024, 1024
      %35 = vsyncadd [#allocation6], %s34
      %s36 = sshll.u32 [#allocation5], 4
      %s37 = int_to_ptr.vmem [resolvable:$true] %s36
      %42 = dma.hbm_to_vmem [thread:$0]  %s4, 1024, %s37, [#allocation6], 64, 64, 4
    $region21: #{multi_layer_gnn_forward.1} parent=1 // pred_fallthru
      _
    // Predicated region
    $region22: #{multi_layer_gnn_forward.1} parent=1 // pred_check
      _
    $region23: #{multi_layer_gnn_forward.1} parent=1 // pred_check_branch
      %44 = sbr.rel (0) target = $region25
    $region24: #{multi_layer_gnn_forward.1} parent=1 // pred_region
      %45 = dma.done [#allocation3], 1024
    $region25: #{multi_layer_gnn_forward.1} parent=1 // pred_fallthru
      _
    // Predicated region
    $region26: #{multi_layer_gnn_forward.1} parent=1 // pred_check
      _
    $region27: #{multi_layer_gnn_forward.1} parent=1 // pred_check_branch
      %47 = sbr.rel (0) target = $region29
    $region28: #{multi_layer_gnn_forward.1} parent=1 // pred_region
      %48 = dma.done [#allocation6], 1024
    $region29: #{multi_layer_gnn_forward.1} parent=1 // pred_fallthru
      _
    %v50 = vld [vmem:[%s0] sm:$0xf]
    %v51 = vld [vmem:[%s0 + $0x4] sm:$0xf]
    %v52 = vld [vmem:[%s1] sm:$0xf]
    %v53 = vld [vmem:[%s1 + $0x4] sm:$0xf]
    %v54 = vld [vmem:[%s2] sm:$0xf]
    %v55 = vld [vmem:[#allocation2] sm:$0xf]
    %v56 = vld [vmem:[#allocation2 + $0x4] sm:$0xf]
    %v57 = vld [vmem:[#allocation2 + $0x8] sm:$0xf]
    %v58 = vld [vmem:[#allocation2 + $0xc] sm:$0xf]
    %v59 = vld [vmem:[#allocation2 + $0x10] sm:$0xf]
    %v60 = vld [vmem:[#allocation2 + $0x14] sm:$0xf]
    %v61 = vld [vmem:[#allocation2 + $0x18] sm:$0xf]
    %v62 = vld [vmem:[#allocation2 + $0x1c] sm:$0xf]
    %v63 = vld [vmem:[#allocation2 + $0x20] sm:$0xf]
    %v64 = vld [vmem:[#allocation2 + $0x24] sm:$0xf]
    %v65 = vld [vmem:[#allocation2 + $0x28] sm:$0xf]
    %v66 = vld [vmem:[#allocation2 + $0x2c] sm:$0xf]
    %v67 = vld [vmem:[#allocation2 + $0x30] sm:$0xf]
    %v68 = vld [vmem:[#allocation2 + $0x34] sm:$0xf]
    %v69 = vld [vmem:[#allocation2 + $0x38] sm:$0xf]
    %v70 = vld [vmem:[#allocation2 + $0x3c] sm:$0xf]
    %v71 = vld [vmem:[#allocation5] sm:$0xf]
    %v72 = vld [vmem:[#allocation5 + $0x4] sm:$0xf]
    %v73 = vld [vmem:[#allocation5 + $0x8] sm:$0xf]
    %v74 = vld [vmem:[#allocation5 + $0xc] sm:$0xf]
    %v75 = vld [vmem:[#allocation5 + $0x10] sm:$0xf]
    %v76 = vld [vmem:[#allocation5 + $0x14] sm:$0xf]
    %v77 = vld [vmem:[#allocation5 + $0x18] sm:$0xf]
    %v78 = vld [vmem:[#allocation5 + $0x1c] sm:$0xf]
    %v79 = vld [vmem:[#allocation5 + $0x20] sm:$0xf]
    %v80 = vld [vmem:[#allocation5 + $0x24] sm:$0xf]
    %v81 = vld [vmem:[#allocation5 + $0x28] sm:$0xf]
    %v82 = vld [vmem:[#allocation5 + $0x2c] sm:$0xf]
    %v83 = vld [vmem:[#allocation5 + $0x30] sm:$0xf]
    %v84 = vld [vmem:[#allocation5 + $0x34] sm:$0xf]
    %v85 = vld [vmem:[#allocation5 + $0x38] sm:$0xf]
    %v86 = vld [vmem:[#allocation5 + $0x3c] sm:$0xf]
    %v89 = vunpack.c.l.b16 %v52
    %v90 = vunpack.c.l.b16 %v53
    %v91 = vpack.c.b16 %v90, %v89
    %vm92 = vcmask 64512
    %v94 = vsel %vm92, %v91, 0
    %vm96 = vcmask 1043456
    %v98 = vsel %vm96, %v54, 0
    %100 = vmatprep.subr.bf16.mxu0 0
    %101 = vmatpush1.bf16.msra.mxu0 %v98
    %102 = vmatprep.subr.bf16.mxu0 0
    %103 = vmatpush1.bf16.msra.mxu0 0
    %104 = vmatprep.subr.bf16.mxu0 0
    %105 = vmatpush1.bf16.msra.mxu0 0
    %106 = vmatprep.subr.bf16.mxu0 0
    %107 = vmatpush1.bf16.msra.mxu0 0
    %108 = vmatprep.subr.bf16.mxu0 0
    %109 = vmatpush1.bf16.msra.mxu0 0
    %110 = vmatprep.subr.bf16.mxu0 0
    %111 = vmatpush1.bf16.msra.mxu0 0
    %112 = vmatprep.subr.bf16.mxu0 0
    %113 = vmatpush1.bf16.msra.mxu0 0
    %114 = vmatprep.subr.bf16.mxu0 0
    %115 = vmatpush1.bf16.msra.mxu0 0
    %116 = vmatprep.subr.bf16.mxu0 0
    %117 = vmatpush1.bf16.msra.mxu0 0
    %118 = vmatprep.subr.bf16.mxu0 0
    %119 = vmatpush1.bf16.msra.mxu0 0
    %120 = vmatprep.subr.bf16.mxu0 0
    %121 = vmatpush1.bf16.msra.mxu0 0
    %122 = vmatprep.subr.bf16.mxu0 0
    %123 = vmatpush1.bf16.msra.mxu0 0
    %124 = vmatprep.subr.bf16.mxu0 0
    %125 = vmatpush1.bf16.msra.mxu0 0
    %126 = vmatprep.subr.bf16.mxu0 0
    %127 = vmatpush1.bf16.msra.mxu0 0
    %128 = vmatprep.subr.bf16.mxu0 0
    %129 = vmatpush1.bf16.msra.mxu0 0
    %130 = vmatprep.subr.bf16.mxu0 0
    %131 = vmatpush1.bf16.msra.mxu0 0
    %132 = vmatprep.mubr.bf16.mxu0 0
    %133 = vmatmul.mubr.bf16.gmra.mrb[0].mxu0 %v94
    %v134 = vpop.f32.mrb[0].mxu0
    %v135 = vadd.f32 0.0, %v134
    %v136 = vpop.f32.mrb[0].mxu0
    %v137 = vpop.f32.mrb[0].mxu0
    %v138 = vadd.f32 0.0, %v137
    %v139 = vpop.f32.mrb[0].mxu0
    %140 = vdwg.mxu0
    %v141 = vpack.c.bf16 %v138, %v135
    %v144 = vunpack.c.l.b16 %v50
    %v145 = vunpack.c.l.b16 %v51
    %v146 = vpack.c.b16 %v145, %v144
    %vm147 = vcmask 130048
    %v149 = vsel %vm147, %v146, 0
    %151 = vmatprep.subr.bf16.mxu0 0
    %152 = vmatpush1.bf16.msra.mxu0 %v141
    %153 = vmatprep.subr.bf16.mxu0 0
    %154 = vmatpush1.bf16.msra.mxu0 0
    %155 = vmatprep.subr.bf16.mxu0 0
    %156 = vmatpush1.bf16.msra.mxu0 0
    %157 = vmatprep.subr.bf16.mxu0 0
    %158 = vmatpush1.bf16.msra.mxu0 0
    %159 = vmatprep.subr.bf16.mxu0 0
    %160 = vmatpush1.bf16.msra.mxu0 0
    %161 = vmatprep.subr.bf16.mxu0 0
    %162 = vmatpush1.bf16.msra.mxu0 0
    %163 = vmatprep.subr.bf16.mxu0 0
    %164 = vmatpush1.bf16.msra.mxu0 0
    %165 = vmatprep.subr.bf16.mxu0 0
    %166 = vmatpush1.bf16.msra.mxu0 0
    %167 = vmatprep.subr.bf16.mxu0 0
    %168 = vmatpush1.bf16.msra.mxu0 0
    %169 = vmatprep.subr.bf16.mxu0 0
    %170 = vmatpush1.bf16.msra.mxu0 0
    %171 = vmatprep.subr.bf16.mxu0 0
    %172 = vmatpush1.bf16.msra.mxu0 0
    %173 = vmatprep.subr.bf16.mxu0 0
    %174 = vmatpush1.bf16.msra.mxu0 0
    %175 = vmatprep.subr.bf16.mxu0 0
    %176 = vmatpush1.bf16.msra.mxu0 0
    %177 = vmatprep.subr.bf16.mxu0 0
    %178 = vmatpush1.bf16.msra.mxu0 0
    %179 = vmatprep.subr.bf16.mxu0 0
    %180 = vmatpush1.bf16.msra.mxu0 0
    %181 = vmatprep.subr.bf16.mxu0 0
    %182 = vmatpush1.bf16.msra.mxu0 0
    %183 = vmatprep.mubr.bf16.mxu0 0
    %184 = vmatmul.mubr.bf16.gmra.mrb[0].mxu0 %v149
    %v185 = vpop.f32.mrb[0].mxu0
    %v186 = vadd.f32 0.0, %v185
    %v187 = vpop.f32.mrb[0].mxu0
    %v188 = vpop.f32.mrb[0].mxu0
    %v189 = vadd.f32 0.0, %v188
    %v190 = vpop.f32.mrb[0].mxu0
    %191 = vdwg.mxu0
    %v192 = vtanh.pop %v186
    %v193 = vtanh.pop %v189
    %v194 = vpack.c.bf16 %v193, %v192
    %v211 = vunpack.c.l.b16 %v55
    %v212 = vunpack.c.l.b16 %v56
    %v213 = vunpack.c.l.b16 %v57
    %v214 = vunpack.c.l.b16 %v58
    %v215 = vunpack.c.l.b16 %v59
    %v216 = vunpack.c.l.b16 %v60
    %v217 = vunpack.c.l.b16 %v61
    %v218 = vunpack.c.l.b16 %v62
    %v219 = vunpack.c.l.b16 %v63
    %v220 = vunpack.c.l.b16 %v64
    %v221 = vunpack.c.l.b16 %v65
    %v222 = vunpack.c.l.b16 %v66
    %v223 = vunpack.c.l.b16 %v67
    %v224 = vunpack.c.l.b16 %v68
    %v225 = vunpack.c.l.b16 %v69
    %v226 = vunpack.c.l.b16 %v70
    %v227 = vpack.c.b16 %v212, %v211
    %v228 = vpack.c.b16 %v214, %v213
    %v229 = vpack.c.b16 %v216, %v215
    %v230 = vpack.c.b16 %v218, %v217
    %v231 = vpack.c.b16 %v220, %v219
    %v232 = vpack.c.b16 %v222, %v221
    %v233 = vpack.c.b16 %v224, %v223
    %v234 = vpack.c.b16 %v226, %v225
    %243 = vmatprep.subr.bf16.mxu0 0
    %244 = vmatpush1.bf16.msra.mxu0 %v227
    %245 = vmatprep.subr.bf16.mxu0 0
    %246 = vmatpush1.bf16.msra.mxu0 %v228
    %247 = vmatprep.subr.bf16.mxu0 0
    %248 = vmatpush1.bf16.msra.mxu0 %v229
    %249 = vmatprep.subr.bf16.mxu0 0
    %250 = vmatpush1.bf16.msra.mxu0 %v230
    %251 = vmatprep.subr.bf16.mxu0 0
    %252 = vmatpush1.bf16.msra.mxu0 %v231
    %253 = vmatprep.subr.bf16.mxu0 0
    %254 = vmatpush1.bf16.msra.mxu0 %v232
    %255 = vmatprep.subr.bf16.mxu0 0
    %256 = vmatpush1.bf16.msra.mxu0 %v233
    %257 = vmatprep.subr.bf16.mxu0 0
    %258 = vmatpush1.bf16.msra.mxu0 %v234
    %259 = vmatprep.subr.bf16.mxu0 0
    %260 = vmatpush1.bf16.msra.mxu0 0
    %261 = vmatprep.subr.bf16.mxu0 0
    %262 = vmatpush1.bf16.msra.mxu0 0
    %263 = vmatprep.subr.bf16.mxu0 0
    %264 = vmatpush1.bf16.msra.mxu0 0
    %265 = vmatprep.subr.bf16.mxu0 0
    %266 = vmatpush1.bf16.msra.mxu0 0
    %267 = vmatprep.subr.bf16.mxu0 0
    %268 = vmatpush1.bf16.msra.mxu0 0
    %269 = vmatprep.subr.bf16.mxu0 0
    %270 = vmatpush1.bf16.msra.mxu0 0
    %271 = vmatprep.subr.bf16.mxu0 0
    %272 = vmatpush1.bf16.msra.mxu0 0
    %273 = vmatprep.subr.bf16.mxu0 0
    %274 = vmatpush1.bf16.msra.mxu0 0
    %275 = vmatprep.mubr.bf16.mxu0 0
    %276 = vmatmul.mubr.bf16.gmra.mrb[0].mxu0 %v194
    %v277 = vpop.f32.mrb[0].mxu0
    %v278 = vadd.f32 0.0, %v277
    %v279 = vpop.f32.mrb[0].mxu0
    %v280 = vpop.f32.mrb[0].mxu0
    %v281 = vadd.f32 0.0, %v280
    %v282 = vpop.f32.mrb[0].mxu0
    %283 = vdwg.mxu0
    %v284 = vpack.c.bf16 %v281, %v278
    %285 = vmatprep.subr.bf16.mxu0 0
    %286 = vmatpush1.bf16.msra.mxu0 %v284
    %287 = vmatprep.subr.bf16.mxu0 0
    %288 = vmatpush1.bf16.msra.mxu0 0
    %289 = vmatprep.subr.bf16.mxu0 0
    %290 = vmatpush1.bf16.msra.mxu0 0
    %291 = vmatprep.subr.bf16.mxu0 0
    %292 = vmatpush1.bf16.msra.mxu0 0
    %293 = vmatprep.subr.bf16.mxu0 0
    %294 = vmatpush1.bf16.msra.mxu0 0
    %295 = vmatprep.subr.bf16.mxu0 0
    %296 = vmatpush1.bf16.msra.mxu0 0
    %297 = vmatprep.subr.bf16.mxu0 0
    %298 = vmatpush1.bf16.msra.mxu0 0
    %299 = vmatprep.subr.bf16.mxu0 0
    %300 = vmatpush1.bf16.msra.mxu0 0
    %301 = vmatprep.subr.bf16.mxu0 0
    %302 = vmatpush1.bf16.msra.mxu0 0
    %303 = vmatprep.subr.bf16.mxu0 0
    %304 = vmatpush1.bf16.msra.mxu0 0
    %305 = vmatprep.subr.bf16.mxu0 0
    %306 = vmatpush1.bf16.msra.mxu0 0
    %307 = vmatprep.subr.bf16.mxu0 0
    %308 = vmatpush1.bf16.msra.mxu0 0
    %309 = vmatprep.subr.bf16.mxu0 0
    %310 = vmatpush1.bf16.msra.mxu0 0
    %311 = vmatprep.subr.bf16.mxu0 0
    %312 = vmatpush1.bf16.msra.mxu0 0
    %313 = vmatprep.subr.bf16.mxu0 0
    %314 = vmatpush1.bf16.msra.mxu0 0
    %315 = vmatprep.subr.bf16.mxu0 0
    %316 = vmatpush1.bf16.msra.mxu0 0
    %317 = vmatprep.mubr.bf16.mxu0 0
    %318 = vmatmul.mubr.bf16.gmra.mrb[0].mxu0 %v149
    %v319 = vpop.f32.mrb[0].mxu0
    %v320 = vadd.f32 0.0, %v319
    %v321 = vpop.f32.mrb[0].mxu0
    %v322 = vpop.f32.mrb[0].mxu0
    %v323 = vadd.f32 0.0, %v322
    %v324 = vpop.f32.mrb[0].mxu0
    %325 = vdwg.mxu0
    %v326 = vtanh.pop %v320
    %v327 = vtanh.pop %v323
    %v328 = vmax.f32 %v192, %v326
    %v329 = vmax.f32 %v193, %v327
    %v330 = vpack.c.bf16 %v327, %v326
    %v347 = vunpack.c.l.b16 %v71
    %v348 = vunpack.c.l.b16 %v72
    %v349 = vunpack.c.l.b16 %v73
    %v350 = vunpack.c.l.b16 %v74
    %v351 = vunpack.c.l.b16 %v75
    %v352 = vunpack.c.l.b16 %v76
    %v353 = vunpack.c.l.b16 %v77
    %v354 = vunpack.c.l.b16 %v78
    %v355 = vunpack.c.l.b16 %v79
    %v356 = vunpack.c.l.b16 %v80
    %v357 = vunpack.c.l.b16 %v81
    %v358 = vunpack.c.l.b16 %v82
    %v359 = vunpack.c.l.b16 %v83
    %v360 = vunpack.c.l.b16 %v84
    %v361 = vunpack.c.l.b16 %v85
    %v362 = vunpack.c.l.b16 %v86
    %v363 = vpack.c.b16 %v348, %v347
    %v364 = vpack.c.b16 %v350, %v349
    %v365 = vpack.c.b16 %v352, %v351
    %v366 = vpack.c.b16 %v354, %v353
    %v367 = vpack.c.b16 %v356, %v355
    %v368 = vpack.c.b16 %v358, %v357
    %v369 = vpack.c.b16 %v360, %v359
    %v370 = vpack.c.b16 %v362, %v361
    %379 = vmatprep.subr.bf16.mxu0 0
    %380 = vmatpush1.bf16.msra.mxu0 %v363
    %381 = vmatprep.subr.bf16.mxu0 0
    %382 = vmatpush1.bf16.msra.mxu0 %v364
    %383 = vmatprep.subr.bf16.mxu0 0
    %384 = vmatpush1.bf16.msra.mxu0 %v365
    %385 = vmatprep.subr.bf16.mxu0 0
    %386 = vmatpush1.bf16.msra.mxu0 %v366
    %387 = vmatprep.subr.bf16.mxu0 0
    %388 = vmatpush1.bf16.msra.mxu0 %v367
    %389 = vmatprep.subr.bf16.mxu0 0
    %390 = vmatpush1.bf16.msra.mxu0 %v368
    %391 = vmatprep.subr.bf16.mxu0 0
    %392 = vmatpush1.bf16.msra.mxu0 %v369
    %393 = vmatprep.subr.bf16.mxu0 0
    %394 = vmatpush1.bf16.msra.mxu0 %v370
    %395 = vmatprep.subr.bf16.mxu0 0
    %396 = vmatpush1.bf16.msra.mxu0 0
    %397 = vmatprep.subr.bf16.mxu0 0
    %398 = vmatpush1.bf16.msra.mxu0 0
    %399 = vmatprep.subr.bf16.mxu0 0
    %400 = vmatpush1.bf16.msra.mxu0 0
    %401 = vmatprep.subr.bf16.mxu0 0
    %402 = vmatpush1.bf16.msra.mxu0 0
    %403 = vmatprep.subr.bf16.mxu0 0
    %404 = vmatpush1.bf16.msra.mxu0 0
    %405 = vmatprep.subr.bf16.mxu0 0
    %406 = vmatpush1.bf16.msra.mxu0 0
    %407 = vmatprep.subr.bf16.mxu0 0
    %408 = vmatpush1.bf16.msra.mxu0 0
    %409 = vmatprep.subr.bf16.mxu0 0
    %410 = vmatpush1.bf16.msra.mxu0 0
    %411 = vmatprep.mubr.bf16.mxu0 0
    %412 = vmatmul.mubr.bf16.gmra.mrb[0].mxu0 %v330
    %v413 = vpop.f32.mrb[0].mxu0
    %v414 = vadd.f32 0.0, %v413
    %v415 = vpop.f32.mrb[0].mxu0
    %v416 = vpop.f32.mrb[0].mxu0
    %v417 = vadd.f32 0.0, %v416
    %v418 = vpop.f32.mrb[0].mxu0
    %419 = vdwg.mxu0
    %v420 = vpack.c.bf16 %v417, %v414
    %421 = vmatprep.subr.bf16.mxu0 0
    %422 = vmatpush1.bf16.msra.mxu0 %v420
    %423 = vmatprep.subr.bf16.mxu0 0
    %424 = vmatpush1.bf16.msra.mxu0 0
    %425 = vmatprep.subr.bf16.mxu0 0
    %426 = vmatpush1.bf16.msra.mxu0 0
    %427 = vmatprep.subr.bf16.mxu0 0
    %428 = vmatpush1.bf16.msra.mxu0 0
    %429 = vmatprep.subr.bf16.mxu0 0
    %430 = vmatpush1.bf16.msra.mxu0 0
    %431 = vmatprep.subr.bf16.mxu0 0
    %432 = vmatpush1.bf16.msra.mxu0 0
    %433 = vmatprep.subr.bf16.mxu0 0
    %434 = vmatpush1.bf16.msra.mxu0 0
    %435 = vmatprep.subr.bf16.mxu0 0
    %436 = vmatpush1.bf16.msra.mxu0 0
    %437 = vmatprep.subr.bf16.mxu0 0
    %438 = vmatpush1.bf16.msra.mxu0 0
    %439 = vmatprep.subr.bf16.mxu0 0
    %440 = vmatpush1.bf16.msra.mxu0 0
    %441 = vmatprep.subr.bf16.mxu0 0
    %442 = vmatpush1.bf16.msra.mxu0 0
    %443 = vmatprep.subr.bf16.mxu0 0
    %444 = vmatpush1.bf16.msra.mxu0 0
    %445 = vmatprep.subr.bf16.mxu0 0
    %446 = vmatpush1.bf16.msra.mxu0 0
    %447 = vmatprep.subr.bf16.mxu0 0
    %448 = vmatpush1.bf16.msra.mxu0 0
    %449 = vmatprep.subr.bf16.mxu0 0
    %450 = vmatpush1.bf16.msra.mxu0 0
    %451 = vmatprep.subr.bf16.mxu0 0
    %452 = vmatpush1.bf16.msra.mxu0 0
    %453 = vmatprep.mubr.bf16.mxu0 0
    %454 = vmatmul.mubr.bf16.gmra.mrb[0].mxu0 %v149
    %v455 = vpop.f32.mrb[0].mxu0
    %v456 = vadd.f32 0.0, %v455
    %v457 = vpop.f32.mrb[0].mxu0
    %v458 = vpop.f32.mrb[0].mxu0
    %v459 = vadd.f32 0.0, %v458
    %v460 = vpop.f32.mrb[0].mxu0
    %461 = vdwg.mxu0
    %v462 = vmax.f32 %v328, %v456
    %v463 = vmax.f32 %v329, %v459
    %464 = vst [vmem:[#allocation7] sm:$0xff] %v462
    %465 = vst [vmem:[#allocation7 + $0x8] sm:$0xff] %v463
    // Predicated region
    $region30: #{multi_layer_gnn_forward.1} parent=1 // pred_check
      _
    $region31: #{multi_layer_gnn_forward.1} parent=1 // pred_check_branch
      %467 = sbr.rel (0) target = $region33
    $region32: #{multi_layer_gnn_forward.1} parent=1 // pred_region
      %s469 = ssub.s32 256, 256
      %470 = vsyncadd [#allocation4], %s469
      %s471 = sshll.u32 [#allocation7], 4
      %s472 = int_to_ptr.vmem [resolvable:$true] %s471
      %477 = dma.vmem_to_hbm [thread:$0]  %s472, 256, %s5, [#allocation4], 128, 128, 8
    $region33: #{multi_layer_gnn_forward.1} parent=1 // pred_fallthru
      _
    // Predicated region
    $region34: #{multi_layer_gnn_forward.1} parent=1 // pred_check
      _
    $region35: #{multi_layer_gnn_forward.1} parent=1 // pred_check_branch
      %479 = sbr.rel (0) target = $region37
    $region36: #{multi_layer_gnn_forward.1} parent=1 // pred_region
      %480 = dma.done [#allocation4], 256
    $region37: #{multi_layer_gnn_forward.1} parent=1 // pred_fallthru
      _
    %481 = vsyncpa [#allocation3], 1
    %482 = vsyncpa [#allocation6], 1
    %483 = vsyncpa [#allocation4], 1

</llo_original>
